<compile_context>
chip_gen: v7x
topology: tpu7x:2x2x1
jax: 0.10.0
libtpu: 0.0.40
codegen_flags: <defaults>
</compile_context>

<pallas_src>
import math

import jax
import jax.numpy as jnp
from jax.experimental import pallas as pl
from jax.experimental.pallas import tpu as pltpu


# --------------------------------------------------------------------------
# Pallas kernel: global + local (sampled-pair) coherence, BB batch elems/step
# --------------------------------------------------------------------------
def _coherence_kernel(idx_ref,        # VMEM (BB, 2S, 1) int32   pair indices
                      states_ref,     # VMEM (BB, N, H)          compute dtype
                      w1c_a_ref,      # VMEM (H, H)    coherence_net W1 (top rows)
                      w1c_b_ref,      # VMEM (H, H)    coherence_net W1 (bottom rows)
                      w1g_ref,        # VMEM (H, H2)   global_coherence W1
                      aux_ref,        # VMEM (8, Wp) f32  packed small vectors
                      out_ref):       # VMEM (BB, 1, 2) f32  [local, global]
    BB, N, H = states_ref.shape
    S2 = idx_ref.shape[1]             # 2 * n_samples
    S = S2 // 2
    H2 = w1g_ref.shape[1]
    dt = states_ref.dtype             # compute dtype (f32 or bf16)

    # unpack the packed aux operand (all slices are lane-0 prefixes, f32)
    aux = aux_ref[...]
    b1c = aux[0:1, :H]                # (1, H)
    b1g = aux[1:2, :H2]               # (1, H2)
    w2c = aux[2:3, :H]                # (1, H)   coherence_net layer-2 row
    w2g = aux[3:4, :H2]               # (1, H2)  global_coherence layer-2 row
    b2c = aux[4:5, 0:1]               # (1, 1)
    b2g = aux[5:6, 0:1]               # (1, 1)

    # ---- one-hot selection matmul: pair gather + global mean in one MXU op --
    idx = idx_ref[...]                                              # (BB, 2S, 1)
    lane_n = jax.lax.broadcasted_iota(jnp.int32, (BB, S2, N), 2)
    sel_pairs = jnp.where(lane_n == idx, 1.0, 0.0).astype(dt)       # (BB, 2S, N)
    mean_row = jnp.full((BB, 1, N), 1.0 / N, dtype=dt)              # folded mean
    sel = jnp.concatenate([sel_pairs, mean_row], axis=1)            # (BB, 2S+1, N)

    gathered = jax.lax.dot_general(                                 # (BB, 2S+1, H)
        sel, states_ref[...],
        dimension_numbers=(((2,), (1,)), ((0,), (0,))),
        preferred_element_type=jnp.float32).astype(dt)

    s1 = gathered[:, :S, :].reshape(BB * S, H)                      # state1 rows
    s2 = gathered[:, S:S2, :].reshape(BB * S, H)                    # state2 rows
    mean_state = gathered[:, S2:, :].reshape(BB, H)                 # mean over states

    # ---- local coherence: [s1 | s2] @ W1c == s1 @ W1c_a + s2 @ W1c_b --------
    hc = (jnp.dot(s1, w1c_a_ref[...], preferred_element_type=jnp.float32)
          + jnp.dot(s2, w1c_b_ref[...], preferred_element_type=jnp.float32)
          + b1c)                                                    # (BB*S, H) f32
    hc = jnp.maximum(hc, 0.0)
    # output-dim-1 "matmul" as VPU mul + XLU lane reduce (keeps MXU free)
    c = jax.nn.sigmoid(jnp.sum(hc * w2c, axis=-1, keepdims=True) + b2c)  # (BB*S, 1)
    local = jnp.mean(c.reshape(BB, S, 1), axis=1)                   # (BB, 1)

    # ---- global coherence ----------------------------------------------------
    hg = jnp.dot(mean_state, w1g_ref[...],
                 preferred_element_type=jnp.float32) + b1g          # (BB, H2) f32
    hg = jnp.maximum(hg, 0.0)
    g = jax.nn.sigmoid(jnp.sum(hg * w2g, axis=-1, keepdims=True) + b2g)  # (BB, 1)

    # single merged store per grid step: [local, global]
    out_ref[...] = jnp.concatenate([local, g], axis=-1).reshape(BB, 1, 2)


# --------------------------------------------------------------------------
# Wrapper
# --------------------------------------------------------------------------
def _choose_batch_block(batch, target=128):
    """Largest divisor of `batch` <= target, keeping >= 2 grid steps when
    possible so v7x megacore has work to split across both TensorCores."""
    divisors = [d for d in range(1, batch + 1) if batch % d == 0 and d <= target]
    bb = max(divisors)
    if bb == batch and batch > 1:
        bb = max(d for d in divisors if d < batch)
    return bb


def coherence_forward(states, params, key, *, compute_dtype=jnp.float32):
    """Pallas implementation of EfficientCoherenceComputer.forward.

    states: (B, N, H) float32
    returns (local_coh: (B,), global_coh: (B,), idx: (B, 2S) int32)
    """
    B, N, H = states.shape
    S = min(N * 2, 10)                       # n_samples
    H2 = params["w1g"].shape[1]
    Wp = params["aux"].shape[1]

    # pair indices (equivalent of the torch.randint loop) as a tiny int32 operand
    idx = jax.random.randint(key, (B, 2 * S), 0, N, dtype=jnp.int32)
    idx3 = idx.reshape(B, 2 * S, 1)

    BB = _choose_batch_block(B)
    nb = B // BB

    itm = jnp.dtype(compute_dtype).itemsize
    states_c = states.astype(compute_dtype)
    w1c_a = params["w1c_a"].astype(compute_dtype)
    w1c_b = params["w1c_b"].astype(compute_dtype)
    w1g = params["w1g"].astype(compute_dtype)

    flops = B * (2 * (2 * S + 1) * N * H     # selection matmul (+ folded mean)
                 + 2 * S * 2 * H * H         # pair layer-1 GEMMs
                 + 2 * S * H                 # pair layer-2 reduce
                 + 2 * H * H2                # global layer-1 GEMM
                 + 2 * H2)                   # global layer-2 reduce
    bytes_accessed = (B * N * H * itm + (2 * H * H + H * H2) * itm
                      + 8 * Wp * 4 + B * 2 * S * 4 + B * 2 * 4)
    cost = pl.CostEstimate(flops=flops, transcendentals=B * (S + 1),
                           bytes_accessed=bytes_accessed)

    # per-step VMEM: double-buffered per-step operands + grid-invariant weights
    step_bytes = (2 * BB * N * H * itm             # states blocks
                  + 2 * BB * 2 * S * 4             # idx blocks
                  + 2 * BB * 2 * 4                 # output blocks
                  + 2 * (2 * H * H + H * H2) * itm # W1 tiles (default 2 bufs)
                  + 2 * 8 * Wp * 4)                # aux
    # cap chosen for v5e/v6e (128 MiB physical VMEM); re-derive <= 64 MiB on v7x
    vmem_limit = int(min(96 * 2**20, max(32 * 2**20, 2 * step_bytes)))

    out = pl.pallas_call(
        _coherence_kernel,
        out_shape=jax.ShapeDtypeStruct((B, 1, 2), jnp.float32),
        grid=(nb,),
        in_specs=[
            pl.BlockSpec((BB, 2 * S, 1), lambda b: (b, 0, 0)),   # idx
            pl.BlockSpec((BB, N, H), lambda b: (b, 0, 0)),       # states block
            pl.BlockSpec((H, H), lambda b: (0, 0)),              # w1c_a (invariant)
            pl.BlockSpec((H, H), lambda b: (0, 0)),              # w1c_b (invariant)
            pl.BlockSpec((H, H2), lambda b: (0, 0)),             # w1g   (invariant)
            pl.BlockSpec((8, Wp), lambda b: (0, 0)),             # aux   (invariant)
        ],
        out_specs=pl.BlockSpec((BB, 1, 2), lambda b: (b, 0, 0)),
        compiler_params=pltpu.CompilerParams(
            dimension_semantics=("parallel",),        # megacore on v7x
            vmem_limit_bytes=vmem_limit),
        cost_estimate=cost,
    )(idx3, states_c, w1c_a, w1c_b, w1g, params["aux"])

    return out[:, 0, 0], out[:, 0, 1], idx


# --------------------------------------------------------------------------
# Deterministic parameter init (mimics nn.Linear default uniform init).
# Weights stored as (in_features, out_features); W1c pre-split into its top /
# bottom H rows; all small vectors packed once into a single (8, Wp) operand.
# --------------------------------------------------------------------------
def init_params(hidden_dim, key):
    H = hidden_dim
    H2 = H // 2
    Wp = ((H + 127) // 128) * 128

    def linear(k, fan_in, fan_out):
        kw, kb = jax.random.split(k)
        bound = 1.0 / math.sqrt(fan_in)
        w = jax.random.uniform(kw, (fan_in, fan_out), jnp.float32, -bound, bound)
        b = jax.random.uniform(kb, (fan_out,), jnp.float32, -bound, bound)
        return w, b

    k1, k2, k3, k4 = jax.random.split(key, 4)
    w1c, b1c = linear(k1, 2 * H, H)     # coherence_net[0]
    w2c, b2c = linear(k2, H, 1)         # coherence_net[2]
    w1g, b1g = linear(k3, H, H2)        # global_coherence[0]
    w2g, b2g = linear(k4, H2, 1)        # global_coherence[2]

    aux = jnp.zeros((8, Wp), jnp.float32)
    aux = aux.at[0, :H].set(b1c)
    aux = aux.at[1, :H2].set(b1g)
    aux = aux.at[2, :H].set(w2c[:, 0])
    aux = aux.at[3, :H2].set(w2g[:, 0])
    aux = aux.at[4, 0].set(b2c[0])
    aux = aux.at[5, 0].set(b2g[0])

    return dict(w1c_a=w1c[:H], w1c_b=w1c[H:], w1g=w1g, aux=aux)


# --------------------------------------------------------------------------
# Pure-JAX reference for validation (uses the same sampled indices)
# --------------------------------------------------------------------------
def reference_forward(states, idx, params):
    B, N, H = states.shape
    S = idx.shape[1] // 2
    H2 = params["w1g"].shape[1]
    aux = params["aux"]
    b1c, b1g = aux[0, :H], aux[1, :H2]
    w2c, w2g = aux[2, :H], aux[3, :H2]
    b2c, b2g = aux[4, 0], aux[5, 0]

    mean_state = states.mean(axis=1)
    hg = jnp.maximum(mean_state @ params["w1g"] + b1g, 0.0)
    global_coh = jax.nn.sigmoid(hg @ w2g + b2g)                    # (B,)

    idx1, idx2 = idx[:, :S], idx[:, S:]
    bidx = jnp.arange(B)[:, None]
    s1 = states[bidx, idx1]                                        # (B, S, H)
    s2 = states[bidx, idx2]
    hc = jnp.maximum(s1 @ params["w1c_a"] + s2 @ params["w1c_b"] + b1c, 0.0)
    c = jax.nn.sigmoid(hc @ w2c + b2c)                             # (B, S)
    local_coh = c.mean(axis=1)
    return local_coh, global_coh


if __name__ == "__main__":
    B, N, H = 2, 8, 32                   # batch, n_states, hidden_dim

    key = jax.random.PRNGKey(0)
    k_states, k_params, k_sample = jax.random.split(key, 3)

    states = jax.random.normal(k_states, (B, N, H), dtype=jnp.float32)
    params = init_params(H, k_params)

    # ---- f32 path (default): bit-tight vs the pure-JAX reference -----------
    local_coh, global_coh, idx = coherence_forward(states, params, k_sample)
    jax.block_until_ready((local_coh, global_coh))

    ref_local, ref_global = reference_forward(states, idx, params)
    assert local_coh.shape == (B,) and global_coh.shape == (B,)
    assert jnp.allclose(local_coh, ref_local, atol=1e-5, rtol=1e-5)
    assert jnp.allclose(global_coh, ref_global, atol=1e-5, rtol=1e-5)

    # ---- bf16 MXU path (production config per perf review): loose tolerance -
    local_bf, global_bf, idx_bf = coherence_forward(
        states, params, k_sample, compute_dtype=jnp.bfloat16)
    jax.block_until_ready((local_bf, global_bf))

    ref_local_bf, ref_global_bf = reference_forward(states, idx_bf, params)
    assert jnp.allclose(local_bf, ref_local_bf, atol=5e-2, rtol=5e-2)
    assert jnp.allclose(global_bf, ref_global_bf, atol=5e-2, rtol=5e-2)

    print("KERNEL_OK")
</pallas_src>

<mosaic_0001>
module attributes {stable_mosaic.version = 11 : i64} {
  func.func @_coherence_kernel(%arg0: i32, %arg1: memref<1x20x1xi32, #tpu.memory_space<vmem>>, %arg2: memref<1x8x32xf32, #tpu.memory_space<vmem>>, %arg3: memref<32x32xf32, #tpu.memory_space<vmem>>, %arg4: memref<32x32xf32, #tpu.memory_space<vmem>>, %arg5: memref<32x16xf32, #tpu.memory_space<vmem>>, %arg6: memref<8x128xf32, #tpu.memory_space<vmem>>, %arg7: memref<1x1x2xf32, #tpu.memory_space<vmem>>) attributes {dimension_semantics = [#tpu.dimension_semantics<parallel>], iteration_bounds = array<i64: 2>, scalar_prefetch = 0 : i64, scratch_operands = 0 : i64, tpu.core_type = #tpu.core_type<tc>, window_params = [{transform_indices = @transform_0, window_bounds = array<i64: 1, 20, 1>}, {transform_indices = @transform_1, window_bounds = array<i64: 1, 8, 32>}, {pipeline_mode = #tpu.pipeline_mode<synchronous>, transform_indices = @transform_2, window_bounds = array<i64: 32, 32>}, {pipeline_mode = #tpu.pipeline_mode<synchronous>, transform_indices = @transform_3, window_bounds = array<i64: 32, 32>}, {pipeline_mode = #tpu.pipeline_mode<synchronous>, transform_indices = @transform_4, window_bounds = array<i64: 32, 16>}, {pipeline_mode = #tpu.pipeline_mode<synchronous>, transform_indices = @transform_5, window_bounds = array<i64: 8, 128>}, {transform_indices = @transform_6, window_bounds = array<i64: 1, 1, 2>}]} {
    %c0 = arith.constant 0 : index
    %c0_0 = arith.constant 0 : index
    %0 = vector.load %arg6[%c0, %c0_0] : memref<8x128xf32, #tpu.memory_space<vmem>>, vector<8x128xf32>
    %1 = vector.extract_strided_slice %0 {offsets = [0, 0], sizes = [1, 32], strides = [1, 1]} : vector<8x128xf32> to vector<1x32xf32>
    %2 = vector.extract_strided_slice %0 {offsets = [1, 0], sizes = [1, 16], strides = [1, 1]} : vector<8x128xf32> to vector<1x16xf32>
    %3 = vector.extract_strided_slice %0 {offsets = [2, 0], sizes = [1, 32], strides = [1, 1]} : vector<8x128xf32> to vector<1x32xf32>
    %4 = vector.extract_strided_slice %0 {offsets = [3, 0], sizes = [1, 16], strides = [1, 1]} : vector<8x128xf32> to vector<1x16xf32>
    %5 = vector.extract_strided_slice %0 {offsets = [4, 0], sizes = [1, 1], strides = [1, 1]} : vector<8x128xf32> to vector<1x1xf32>
    %6 = vector.extract_strided_slice %0 {offsets = [5, 0], sizes = [1, 1], strides = [1, 1]} : vector<8x128xf32> to vector<1x1xf32>
    %c0_1 = arith.constant 0 : index
    %c0_2 = arith.constant 0 : index
    %c0_3 = arith.constant 0 : index
    %7 = vector.load %arg1[%c0_1, %c0_2, %c0_3] : memref<1x20x1xi32, #tpu.memory_space<vmem>>, vector<1x20x1xi32>
    %8 = tpu.iota {dimensions = array<i32: 2>} : vector<1x20x8xi32>
    %9 = vector.broadcast %7 : vector<1x20x1xi32> to vector<1x20x8xi32>
    %10 = arith.cmpi eq, %8, %9 : vector<1x20x8xi32>
    %cst = arith.constant 1.000000e+00 : f32
    %cst_4 = arith.constant 0.000000e+00 : f32
    %11 = vector.broadcast %cst : f32 to vector<1x20x8xf32>
    %12 = vector.broadcast %cst_4 : f32 to vector<1x20x8xf32>
    %13 = arith.select %10, %11, %12 : vector<1x20x8xi1>, vector<1x20x8xf32>
    %cst_5 = arith.constant 1.250000e-01 : f32
    %14 = vector.broadcast %cst_5 : f32 to vector<1x1x8xf32>
    %15 = tpu.concatenate %13, %14 in 1 : vector<1x20x8xf32>, vector<1x1x8xf32> -> vector<1x21x8xf32>
    %c0_6 = arith.constant 0 : index
    %c0_7 = arith.constant 0 : index
    %c0_8 = arith.constant 0 : index
    %16 = vector.load %arg2[%c0_6, %c0_7, %c0_8] : memref<1x8x32xf32, #tpu.memory_space<vmem>>, vector<1x8x32xf32>
    %cst_9 = arith.constant dense<0.000000e+00> : vector<1x21x32xf32>
    %17 = tpu.matmul %15, %16, %cst_9 {dimension_numbers = #tpu.dot_dimension_numbers<[2], [1], [1], [2], [0, 0, 0, 1, 1, 2], [0], [0]>} : vector<1x21x8xf32>, vector<1x8x32xf32>, vector<1x21x32xf32> -> vector<1x21x32xf32>
    %18 = vector.extract_strided_slice %17 {offsets = [0, 0, 0], sizes = [1, 10, 32], strides = [1, 1, 1]} : vector<1x21x32xf32> to vector<1x10x32xf32>
    %19 = vector.shape_cast %18 : vector<1x10x32xf32> to vector<10x32xf32>
    %20 = vector.extract_strided_slice %17 {offsets = [0, 10, 0], sizes = [1, 10, 32], strides = [1, 1, 1]} : vector<1x21x32xf32> to vector<1x10x32xf32>
    %21 = vector.shape_cast %20 : vector<1x10x32xf32> to vector<10x32xf32>
    %22 = vector.extract_strided_slice %17 {offsets = [0, 20, 0], sizes = [1, 1, 32], strides = [1, 1, 1]} : vector<1x21x32xf32> to vector<1x1x32xf32>
    %23 = vector.shape_cast %22 : vector<1x1x32xf32> to vector<1x32xf32>
    %c0_10 = arith.constant 0 : index
    %c0_11 = arith.constant 0 : index
    %24 = vector.load %arg3[%c0_10, %c0_11] : memref<32x32xf32, #tpu.memory_space<vmem>>, vector<32x32xf32>
    %cst_12 = arith.constant dense<0.000000e+00> : vector<10x32xf32>
    %25 = tpu.matmul %19, %24, %cst_12 {dimension_numbers = #tpu.dot_dimension_numbers<[1], [0], [0], [1], [0, 0, 1, 1], [], []>} : vector<10x32xf32>, vector<32x32xf32>, vector<10x32xf32> -> vector<10x32xf32>
    %c0_13 = arith.constant 0 : index
    %c0_14 = arith.constant 0 : index
    %26 = vector.load %arg4[%c0_13, %c0_14] : memref<32x32xf32, #tpu.memory_space<vmem>>, vector<32x32xf32>
    %cst_15 = arith.constant dense<0.000000e+00> : vector<10x32xf32>
    %27 = tpu.matmul %21, %26, %cst_15 {dimension_numbers = #tpu.dot_dimension_numbers<[1], [0], [0], [1], [0, 0, 1, 1], [], []>} : vector<10x32xf32>, vector<32x32xf32>, vector<10x32xf32> -> vector<10x32xf32>
    %28 = arith.addf %25, %27 : vector<10x32xf32>
    %29 = vector.broadcast %1 : vector<1x32xf32> to vector<10x32xf32>
    %30 = arith.addf %28, %29 : vector<10x32xf32>
    %cst_16 = arith.constant 0.000000e+00 : f32
    %31 = vector.broadcast %cst_16 : f32 to vector<10x32xf32>
    %32 = arith.maximumf %30, %31 : vector<10x32xf32>
    %33 = vector.broadcast %3 : vector<1x32xf32> to vector<10x32xf32>
    %34 = arith.mulf %32, %33 : vector<10x32xf32>
    %cst_17 = arith.constant dense<0.000000e+00> : vector<10xf32>
    %35 = vector.multi_reduction <add>, %34, %cst_17 [1] : vector<10x32xf32> to vector<10xf32>
    %36 = vector.shape_cast %35 : vector<10xf32> to vector<10x1xf32>
    %37 = vector.broadcast %5 : vector<1x1xf32> to vector<10x1xf32>
    %38 = arith.addf %36, %37 : vector<10x1xf32>
    %39 = arith.negf %38 : vector<10x1xf32>
    %40 = math.exp %39 : vector<10x1xf32>
    %cst_18 = arith.constant 1.000000e+00 : f32
    %41 = vector.broadcast %cst_18 : f32 to vector<10x1xf32>
    %42 = arith.addf %41, %40 : vector<10x1xf32>
    %43 = arith.divf %41, %42 : vector<10x1xf32>
    %44 = vector.shape_cast %43 : vector<10x1xf32> to vector<1x10x1xf32>
    %cst_19 = arith.constant dense<0.000000e+00> : vector<1x1xf32>
    %45 = vector.multi_reduction <add>, %44, %cst_19 [1] : vector<1x10x1xf32> to vector<1x1xf32>
    %cst_20 = arith.constant 1.000000e+01 : f32
    %46 = vector.broadcast %cst_20 : f32 to vector<1x1xf32>
    %47 = arith.divf %45, %46 : vector<1x1xf32>
    %c0_21 = arith.constant 0 : index
    %c0_22 = arith.constant 0 : index
    %48 = vector.load %arg5[%c0_21, %c0_22] : memref<32x16xf32, #tpu.memory_space<vmem>>, vector<32x16xf32>
    %cst_23 = arith.constant dense<0.000000e+00> : vector<1x16xf32>
    %49 = tpu.matmul %23, %48, %cst_23 {dimension_numbers = #tpu.dot_dimension_numbers<[1], [0], [0], [1], [0, 0, 1, 1], [], []>} : vector<1x32xf32>, vector<32x16xf32>, vector<1x16xf32> -> vector<1x16xf32>
    %50 = arith.addf %49, %2 : vector<1x16xf32>
    %cst_24 = arith.constant 0.000000e+00 : f32
    %51 = vector.broadcast %cst_24 : f32 to vector<1x16xf32>
    %52 = arith.maximumf %50, %51 : vector<1x16xf32>
    %53 = arith.mulf %52, %4 : vector<1x16xf32>
    %cst_25 = arith.constant dense<0.000000e+00> : vector<1xf32>
    %54 = vector.multi_reduction <add>, %53, %cst_25 [1] : vector<1x16xf32> to vector<1xf32>
    %55 = vector.shape_cast %54 : vector<1xf32> to vector<1x1xf32>
    %56 = arith.addf %55, %6 : vector<1x1xf32>
    %57 = arith.negf %56 : vector<1x1xf32>
    %58 = math.exp %57 : vector<1x1xf32>
    %cst_26 = arith.constant 1.000000e+00 : f32
    %59 = vector.broadcast %cst_26 : f32 to vector<1x1xf32>
    %60 = arith.addf %59, %58 : vector<1x1xf32>
    %61 = arith.divf %59, %60 : vector<1x1xf32>
    %62 = tpu.concatenate %47, %61 in 1 : vector<1x1xf32>, vector<1x1xf32> -> vector<1x2xf32>
    %63 = vector.shape_cast %62 : vector<1x2xf32> to vector<1x1x2xf32>
    %c0_27 = arith.constant 0 : index
    %c0_28 = arith.constant 0 : index
    %c0_29 = arith.constant 0 : index
    %64 = vector.load %arg7[%c0_27, %c0_28, %c0_29] : memref<1x1x2xf32, #tpu.memory_space<vmem>>, vector<1x1x2xf32>
    tpu.vector_store %arg7[%c0_27, %c0_28, %c0_29], %63 {strides = array<i32>} : memref<1x1x2xf32, #tpu.memory_space<vmem>>, vector<1x1x2xf32>,
    return
  }
  func.func @transform_0(%arg0: i32) -> (i32, i32, i32) {
    %c0_i32 = arith.constant 0 : i32
    %c0_i32_0 = arith.constant 0 : i32
    %c0_i32_1 = arith.constant 0 : i32
    return %arg0, %c0_i32, %c0_i32_0 : i32, i32, i32
  }
  func.func @transform_1(%arg0: i32) -> (i32, i32, i32) {
    %c0_i32 = arith.constant 0 : i32
    %c0_i32_0 = arith.constant 0 : i32
    %c0_i32_1 = arith.constant 0 : i32
    return %arg0, %c0_i32, %c0_i32_0 : i32, i32, i32
  }
  func.func @transform_2(%arg0: i32) -> (i32, i32) {
    %c0_i32 = arith.constant 0 : i32
    %c0_i32_0 = arith.constant 0 : i32
    %c0_i32_1 = arith.constant 0 : i32
    return %c0_i32, %c0_i32_0 : i32, i32
  }
  func.func @transform_3(%arg0: i32) -> (i32, i32) {
    %c0_i32 = arith.constant 0 : i32
    %c0_i32_0 = arith.constant 0 : i32
    %c0_i32_1 = arith.constant 0 : i32
    return %c0_i32, %c0_i32_0 : i32, i32
  }
  func.func @transform_4(%arg0: i32) -> (i32, i32) {
    %c0_i32 = arith.constant 0 : i32
    %c0_i32_0 = arith.constant 0 : i32
    %c0_i32_1 = arith.constant 0 : i32
    return %c0_i32, %c0_i32_0 : i32, i32
  }
  func.func @transform_5(%arg0: i32) -> (i32, i32) {
    %c0_i32 = arith.constant 0 : i32
    %c0_i32_0 = arith.constant 0 : i32
    %c0_i32_1 = arith.constant 0 : i32
    return %c0_i32, %c0_i32_0 : i32, i32
  }
  func.func @transform_6(%arg0: i32) -> (i32, i32, i32) {
    %c0_i32 = arith.constant 0 : i32
    %c0_i32_0 = arith.constant 0 : i32
    %c0_i32_1 = arith.constant 0 : i32
    return %arg0, %c0_i32, %c0_i32_0 : i32, i32, i32
  }
}

</mosaic_0001>

<llo_original>
// kernel: tpu_custom_call.1
$region0: #{tpu_custom_call.1}
  #allocation0 [shape = 'u32[]', space=smem, size = 0x4, offset = 0x4, fixed_abs, tag = 'smem constant byte address 0x4 - core index']
  #allocation1 [shape = 'u32[144,128]{1,0:T(1,128)}', space=vmem, size = 0x12000, scoped, tag = 'internal scratch']
  %s0 = inlined_call_operand.vmem [shape: s32[2,20,1], index: 0, kind: input, shape index: {}]
  %s1 = inlined_call_operand.vmem [shape: f32[2,8,32], index: 1, kind: input, shape index: {}]
  %s2 = inlined_call_operand.vmem [shape: f32[32,32], index: 2, kind: input, shape index: {}]
  %s3 = inlined_call_operand.vmem [shape: f32[32,32], index: 3, kind: input, shape index: {}]
  %s4 = inlined_call_operand.vmem [shape: f32[32,16], index: 4, kind: input, shape index: {}]
  %s5 = inlined_call_operand.vmem [shape: f32[8,128], index: 5, kind: input, shape index: {}]
  %s6 = inlined_call_operand.hbm [shape: f32[2,1,2], index: 6, kind: output, shape index: {}]
  %s7 = sld [smem:[#allocation0]]
  $region57: #{tpu_custom_call.1} parent=0
    _
  %s9 = ssub.s32 1, %s7
  %s10 = scalar_select 0, %s9, %s7
  $region1: #{tpu_custom_call.1} parent=0
    #allocation2 [shape = 'u8[1024]{0}', space=vmem, size = 0x400, scoped, tag = 'output window, operand 0']
    #allocation3 [shape = 's32[2]{0}', space=sflag, size = 0x8, scoped, tag = 'scoped memory for tpu_custom_call.1']
    %11 = vsyncpa [#allocation3], 0
    %s12 = scalar_lea.sflag [#allocation3], 1
    %13 = vsyncpa %s12, 0
    loop: start=0, step=1, limit=4
    $region2: #{tpu_custom_call.1} parent=1 // loop_pre_header
      _
    $region3: #{tpu_custom_call.1} parent=1 // loop_header
      %s15 = sphi 0, %s19
      %p16 = scmp.ge.s32.totalorder %s15, 4
      %s25 = sphi 0, %s27
      %s28 = sphi 0, %s25
      %s29 = sphi 0, %s28
      %s45 = sphi 0, %s29
      %s51 = sphi 0, %s53
      %s54 = sphi 0, %s51
      %s55 = sphi 0, %s54
      %s71 = sphi 0, %s55
      %s75 = sphi 0, %s75
      %s77 = sphi 0, %s75
      %s78 = sphi 0, %s77
      %s92 = sphi 0, %s78
      %s96 = sphi 0, %s96
      %s98 = sphi 0, %s96
      %s99 = sphi 0, %s98
      %s113 = sphi 0, %s99
      %s117 = sphi 0, %s117
      %s119 = sphi 0, %s117
      %s120 = sphi 0, %s119
      %s134 = sphi 0, %s120
      %s138 = sphi 0, %s138
      %s140 = sphi 0, %s138
      %s141 = sphi 0, %s140
      %s155 = sphi 0, %s141
      %s161 = sphi 0, %s163
      %s164 = sphi 0, %s161
      %s165 = sphi 0, %s164
      %s181 = sphi 0, %s165
    $region4: #{tpu_custom_call.1} parent=1 // loop_header_branch
      %18 = sbr.rel (%p16) target = $region8
    $region5: #{tpu_custom_call.1} parent=1 // loop_body
      %s20 = ssub.s32 %s15, 1
      %s21 = ssub.s32 %s15, 2
      %s22 = sadd.s32 %s15, 1
      %s23 = ssub.s32 %s15, %s22
      %p24 = scmp.eq.s32.totalorder %s23, 0
      %s26 = sadd.s32 %s25, 1
      %s27 = scalar_select %p24, %s25, %s26
      %p30 = pneg %p24
      %p31 = scmp.eq.s32.totalorder %s15, 1
      %p32 = por %p30, %p31
      %p33 = scmp.ne.s32.totalorder %s25, %s28
      %p34 = scmp.eq.s32.totalorder %s15, 0
      %p35 = por %p33, %p34
      %p36 = scmp.ne.s32.totalorder %s25, %s28
      %p37 = scmp.eq.s32.totalorder %s20, 1
      %p38 = por %p36, %p37
      %p39 = scmp.ne.s32.totalorder %s28, %s29
      %p40 = scmp.eq.s32.totalorder %s20, 0
      %p41 = por %p39, %p40
      %p42 = scmp.ne.s32.totalorder %s28, %s29
      %p43 = scmp.eq.s32.totalorder %s21, 1
      %p44 = por %p42, %p43
      %p46 = scmp.ne.s32.totalorder %s29, %s45
      %p47 = scmp.eq.s32.totalorder %s21, 0
      %p48 = por %p46, %p47
      %s49 = ssub.s32 %s15, %s22
      %p50 = scmp.eq.s32.totalorder %s49, 0
      %s52 = sadd.s32 %s51, 1
      %s53 = scalar_select %p50, %s51, %s52
      %p56 = pneg %p50
      %p57 = scmp.eq.s32.totalorder %s15, 1
      %p58 = por %p56, %p57
      %p59 = scmp.ne.s32.totalorder %s51, %s54
      %p60 = scmp.eq.s32.totalorder %s15, 0
      %p61 = por %p59, %p60
      %p62 = scmp.ne.s32.totalorder %s51, %s54
      %p63 = scmp.eq.s32.totalorder %s20, 1
      %p64 = por %p62, %p63
      %p65 = scmp.ne.s32.totalorder %s54, %s55
      %p66 = scmp.eq.s32.totalorder %s20, 0
      %p67 = por %p65, %p66
      %p68 = scmp.ne.s32.totalorder %s54, %s55
      %p69 = scmp.eq.s32.totalorder %s21, 1
      %p70 = por %p68, %p69
      %p72 = scmp.ne.s32.totalorder %s55, %s71
      %p73 = scmp.eq.s32.totalorder %s21, 0
      %p74 = por %p72, %p73
      %s76 = sadd.s32 %s75, 1
      %p79 = scmp.eq.s32.totalorder %s15, 1
      %p80 = scmp.ne.s32.totalorder %s75, %s77
      %p81 = scmp.eq.s32.totalorder %s15, 0
      %p82 = por %p80, %p81
      %p83 = scmp.ne.s32.totalorder %s75, %s77
      %p84 = scmp.eq.s32.totalorder %s20, 1
      %p85 = por %p83, %p84
      %p86 = scmp.ne.s32.totalorder %s77, %s78
      %p87 = scmp.eq.s32.totalorder %s20, 0
      %p88 = por %p86, %p87
      %p89 = scmp.ne.s32.totalorder %s77, %s78
      %p90 = scmp.eq.s32.totalorder %s21, 1
      %p91 = por %p89, %p90
      %p93 = scmp.ne.s32.totalorder %s78, %s92
      %p94 = scmp.eq.s32.totalorder %s21, 0
      %p95 = por %p93, %p94
      %s97 = sadd.s32 %s96, 1
      %p100 = scmp.eq.s32.totalorder %s15, 1
      %p101 = scmp.ne.s32.totalorder %s96, %s98
      %p102 = scmp.eq.s32.totalorder %s15, 0
      %p103 = por %p101, %p102
      %p104 = scmp.ne.s32.totalorder %s96, %s98
      %p105 = scmp.eq.s32.totalorder %s20, 1
      %p106 = por %p104, %p105
      %p107 = scmp.ne.s32.totalorder %s98, %s99
      %p108 = scmp.eq.s32.totalorder %s20, 0
      %p109 = por %p107, %p108
      %p110 = scmp.ne.s32.totalorder %s98, %s99
      %p111 = scmp.eq.s32.totalorder %s21, 1
      %p112 = por %p110, %p111
      %p114 = scmp.ne.s32.totalorder %s99, %s113
      %p115 = scmp.eq.s32.totalorder %s21, 0
      %p116 = por %p114, %p115
      %s118 = sadd.s32 %s117, 1
      %p121 = scmp.eq.s32.totalorder %s15, 1
      %p122 = scmp.ne.s32.totalorder %s117, %s119
      %p123 = scmp.eq.s32.totalorder %s15, 0
      %p124 = por %p122, %p123
      %p125 = scmp.ne.s32.totalorder %s117, %s119
      %p126 = scmp.eq.s32.totalorder %s20, 1
      %p127 = por %p125, %p126
      %p128 = scmp.ne.s32.totalorder %s119, %s120
      %p129 = scmp.eq.s32.totalorder %s20, 0
      %p130 = por %p128, %p129
      %p131 = scmp.ne.s32.totalorder %s119, %s120
      %p132 = scmp.eq.s32.totalorder %s21, 1
      %p133 = por %p131, %p132
      %p135 = scmp.ne.s32.totalorder %s120, %s134
      %p136 = scmp.eq.s32.totalorder %s21, 0
      %p137 = por %p135, %p136
      %s139 = sadd.s32 %s138, 1
      %p142 = scmp.eq.s32.totalorder %s15, 1
      %p143 = scmp.ne.s32.totalorder %s138, %s140
      %p144 = scmp.eq.s32.totalorder %s15, 0
      %p145 = por %p143, %p144
      %p146 = scmp.ne.s32.totalorder %s138, %s140
      %p147 = scmp.eq.s32.totalorder %s20, 1
      %p148 = por %p146, %p147
      %p149 = scmp.ne.s32.totalorder %s140, %s141
      %p150 = scmp.eq.s32.totalorder %s20, 0
      %p151 = por %p149, %p150
      %p152 = scmp.ne.s32.totalorder %s140, %s141
      %p153 = scmp.eq.s32.totalorder %s21, 1
      %p154 = por %p152, %p153
      %p156 = scmp.ne.s32.totalorder %s141, %s155
      %p157 = scmp.eq.s32.totalorder %s21, 0
      %p158 = por %p156, %p157
      %s159 = ssub.s32 %s15, %s22
      %p160 = scmp.eq.s32.totalorder %s159, 0
      %s162 = sadd.s32 %s161, 1
      %s163 = scalar_select %p160, %s161, %s162
      %p166 = pneg %p160
      %p167 = scmp.eq.s32.totalorder %s15, 1
      %p168 = por %p166, %p167
      %p169 = scmp.ne.s32.totalorder %s161, %s164
      %p170 = scmp.eq.s32.totalorder %s15, 0
      %p171 = por %p169, %p170
      %p172 = scmp.ne.s32.totalorder %s161, %s164
      %p173 = scmp.eq.s32.totalorder %s20, 1
      %p174 = por %p172, %p173
      %p175 = scmp.ne.s32.totalorder %s164, %s165
      %p176 = scmp.eq.s32.totalorder %s20, 0
      %p177 = por %p175, %p176
      %p178 = scmp.ne.s32.totalorder %s164, %s165
      %p179 = scmp.eq.s32.totalorder %s21, 1
      %p180 = por %p178, %p179
      %p182 = scmp.ne.s32.totalorder %s165, %s181
      %p183 = scmp.eq.s32.totalorder %s21, 0
      %p184 = por %p182, %p183
      %p185 = scmp.le.s32.totalorder 1, %s15
      %p186 = scmp.lt.s32.totalorder %s15, 3
      %p187 = pnand %p185, %p186
      %p188 = pneg %p187
      // Predicated region
      $region9: #{tpu_custom_call.1} parent=5 // pred_check
        _
      $region10: #{tpu_custom_call.1} parent=5 // pred_check_branch
        %190 = sbr.rel (%p187) target = $region12
      $region11: #{tpu_custom_call.1} parent=5 // pred_region
        %s191 = ssub.s32 %s15, 1
        // Predicated region
        $region13: #{tpu_custom_call.1} parent=11 // pred_check
          %p192 = pneg %p88
        $region14: #{tpu_custom_call.1} parent=11 // pred_check_branch
          %194 = sbr.rel (%p192) target = $region16
        $region15: #{tpu_custom_call.1} parent=11 // pred_region
          _
        $region16: #{tpu_custom_call.1} parent=11 // pred_fallthru
          _
        // Predicated region
        $region17: #{tpu_custom_call.1} parent=11 // pred_check
          %p195 = pneg %p109
        $region18: #{tpu_custom_call.1} parent=11 // pred_check_branch
          %197 = sbr.rel (%p195) target = $region20
        $region19: #{tpu_custom_call.1} parent=11 // pred_region
          _
        $region20: #{tpu_custom_call.1} parent=11 // pred_fallthru
          _
        // Predicated region
        $region21: #{tpu_custom_call.1} parent=11 // pred_check
          %p198 = pneg %p130
        $region22: #{tpu_custom_call.1} parent=11 // pred_check_branch
          %200 = sbr.rel (%p198) target = $region24
        $region23: #{tpu_custom_call.1} parent=11 // pred_region
          _
        $region24: #{tpu_custom_call.1} parent=11 // pred_fallthru
          _
        // Predicated region
        $region25: #{tpu_custom_call.1} parent=11 // pred_check
          %p201 = pneg %p151
        $region26: #{tpu_custom_call.1} parent=11 // pred_check_branch
          %203 = sbr.rel (%p201) target = $region28
        $region27: #{tpu_custom_call.1} parent=11 // pred_region
          _
        $region28: #{tpu_custom_call.1} parent=11 // pred_fallthru
          _
      $region12: #{tpu_custom_call.1} parent=5 // pred_fallthru
        _
      %p204 = scmp.lt.s32.totalorder %s15, 2
      // Predicated region
      $region29: #{tpu_custom_call.1} parent=5 // pred_check
        %p205 = pneg %p204
      $region30: #{tpu_custom_call.1} parent=5 // pred_check_branch
        %207 = sbr.rel (%p205) target = $region32
      $region31: #{tpu_custom_call.1} parent=5 // pred_region
        // Predicated region
        $region33: #{tpu_custom_call.1} parent=31 // pred_check
          %p208 = pneg %p35
        $region34: #{tpu_custom_call.1} parent=31 // pred_check_branch
          %210 = sbr.rel (%p208) target = $region36
        $region35: #{tpu_custom_call.1} parent=31 // pred_region
          %p211 = scmp.lt.s32.totalorder %s15, 1
          %s212 = scalar_select %p211, %s15, 1
          %s213 = smul.addr %s212, 3
          %s214 = smul.addr %s213, 8
          %s215 = scalar_lea.vmem %s0, %s214
        $region36: #{tpu_custom_call.1} parent=31 // pred_fallthru
          _
        // Predicated region
        $region37: #{tpu_custom_call.1} parent=31 // pred_check
          %p216 = pneg %p61
        $region38: #{tpu_custom_call.1} parent=31 // pred_check_branch
          %218 = sbr.rel (%p216) target = $region40
        $region39: #{tpu_custom_call.1} parent=31 // pred_region
          %p219 = scmp.lt.s32.totalorder %s15, 1
          %s220 = scalar_select %p219, %s15, 1
          %s221 = smul.addr %s220, 8
          %s222 = scalar_lea.vmem %s1, %s221
        $region40: #{tpu_custom_call.1} parent=31 // pred_fallthru
          _
      $region32: #{tpu_custom_call.1} parent=5 // pred_fallthru
        _
      %p223 = scmp.le.s32.totalorder 1, %s15
      %p224 = scmp.lt.s32.totalorder %s15, 3
      %p225 = pnand %p223, %p224
      %p226 = pneg %p225
      // Predicated region
      $region41: #{tpu_custom_call.1} parent=5 // pred_check
        _
      $region42: #{tpu_custom_call.1} parent=5 // pred_check_branch
        %228 = sbr.rel (%p225) target = $region44
      $region43: #{tpu_custom_call.1} parent=5 // pred_region
        %s229 = ssub.s32 %s15, 1
        %p230 = scmp.lt.s32.totalorder %s20, 1
        %s231 = scalar_select %p230, %s20, 1
        %s232 = smul.addr %s231, 3
        %s233 = smul.addr %s232, 8
        %s234 = scalar_lea.vmem %s0, %s233
        %p235 = pneg %p41
        %p236 = pneg %p38
        %p237 = scmp.lt.s32.totalorder %s20, 1
        %s238 = scalar_select %p237, %s20, 1
        %s239 = smul.addr %s238, 8
        %s240 = scalar_lea.vmem %s1, %s239
        %p241 = pneg %p67
        %p242 = pneg %p64
        %p243 = pneg %p88
        %p244 = pneg %p85
        %p245 = pneg %p109
        %p246 = pneg %p106
        %p247 = pneg %p130
        %p248 = pneg %p127
        %p249 = pneg %p151
        %p250 = pneg %p148
        %p251 = pneg %p177
        %p252 = pneg %p174
        %s253 = sand.u32 %s164, 1
        %s254 = scalar_lea.sflag [#allocation3], %s253
        %s255 = sand.u32 %s164, 1
        %s256 = scalar_lea.vmem [#allocation2], %s255
        %p257 = scmp.lt.s32.totalorder %s20, 1
        %s258 = scalar_select %p257, %s20, 1
        %s259 = smul.addr %s258, 3
        %s260 = smul.addr %s259, 8
        %s261 = scalar_lea.vmem %s0, %s260
        %p262 = scmp.lt.s32.totalorder %s20, 1
        %s263 = scalar_select %p262, %s20, 1
        %s264 = smul.addr %s263, 8
        %s265 = scalar_lea.vmem %s1, %s264
        %v266 = vld [vmem:[%s5] sm:$0xff]
        %v267 = vld [vmem:[%s261] sm:$0xff]
        %v268 = vld [vmem:[%s261 + $0x8] sm:$0xff]
        %v269 = vld [vmem:[%s261 + $0x10] sm:$0xf]
        %v270 = vlaneseq
        %v271 = vand.u32 %v270, 127
        %272 = vset.pattern.permute.xlu0 0
        %273 = vperm.xlu0 %272, %v267
        %v274 = vpop.permute.xlu0 %273
        %275 = vset.pattern.permute.xlu0 0
        %276 = vperm.xlu0 %275, %v268
        %v277 = vpop.permute.xlu0 %276
        %278 = vset.pattern.permute.xlu0 0
        %279 = vperm.xlu0 %278, %v269
        %v280 = vpop.permute.xlu0 %279
        %vm281 = vcmp.eq.s32.totalorder %v271, %v274
        %vm282 = vcmp.eq.s32.totalorder %v271, %v277
        %vm283 = vcmp.eq.s32.totalorder %v271, %v280
        %v284 = vsel %vm281, 1.0, 0.0
        %v285 = vsel %vm282, 1.0, 0.0
        %v286 = vsel %vm283, 1.0, 0.0
        %vm287 = vcmask 1043456
        %v288 = vsel %vm287, %v286, 0.125
        %v289 = vld [vmem:[%s265] sm:$0xff]
        %vm290 = vcmask 64512
        %v292 = vsel %vm290, %v284, 0
        %v295 = vsel %vm290, %v285, 0
        %v298 = vsel %vm290, %v288, 0
        %300 = vmatprep.subr.mxu0 0.0
        %301 = vmatpush1.msra.mxu0 %v289
        %302 = vmatprep.subr.mxu0 0.0
        %303 = vmatpush1.msra.mxu0 0.0
        %304 = vmatprep.subr.mxu0 0.0
        %305 = vmatpush1.msra.mxu0 0.0
        %306 = vmatprep.subr.mxu0 0.0
        %307 = vmatpush1.msra.mxu0 0.0
        %308 = vmatprep.subr.mxu0 0.0
        %309 = vmatpush1.msra.mxu0 0.0
        %310 = vmatprep.subr.mxu0 0.0
        %311 = vmatpush1.msra.mxu0 0.0
        %312 = vmatprep.subr.mxu0 0.0
        %313 = vmatpush1.msra.mxu0 0.0
        %314 = vmatprep.subr.mxu0 0.0
        %315 = vmatpush1.msra.mxu0 0.0
        %316 = vmatprep.subr.mxu0 0.0
        %317 = vmatpush1.msra.mxu0 0.0
        %318 = vmatprep.subr.mxu0 0.0
        %319 = vmatpush1.msra.mxu0 0.0
        %320 = vmatprep.subr.mxu0 0.0
        %321 = vmatpush1.msra.mxu0 0.0
        %322 = vmatprep.subr.mxu0 0.0
        %323 = vmatpush1.msra.mxu0 0.0
        %324 = vmatprep.subr.mxu0 0.0
        %325 = vmatpush1.msra.mxu0 0.0
        %326 = vmatprep.subr.mxu0 0.0
        %327 = vmatpush1.msra.mxu0 0.0
        %328 = vmatprep.subr.mxu0 0.0
        %329 = vmatpush1.msra.mxu0 0.0
        %330 = vmatprep.subr.mxu0 0.0
        %331 = vmatpush1.msra.mxu0 0.0
        %332 = vmatprep.subr.mxu0 0.0
        %333 = vmatpush1.msra.mxu0 0.0
        %334 = vmatprep.subr.mxu0 0.0
        %335 = vmatpush1.msra.mxu0 0.0
        %336 = vmatprep.subr.mxu0 0.0
        %337 = vmatpush1.msra.mxu0 0.0
        %338 = vmatprep.subr.mxu0 0.0
        %339 = vmatpush1.msra.mxu0 0.0
        %340 = vmatprep.subr.mxu0 0.0
        %341 = vmatpush1.msra.mxu0 0.0
        %342 = vmatprep.subr.mxu0 0.0
        %343 = vmatpush1.msra.mxu0 0.0
        %344 = vmatprep.subr.mxu0 0.0
        %345 = vmatpush1.msra.mxu0 0.0
        %346 = vmatprep.subr.mxu0 0.0
        %347 = vmatpush1.msra.mxu0 0.0
        %348 = vmatprep.subr.mxu0 0.0
        %349 = vmatpush1.msra.mxu0 0.0
        %350 = vmatprep.subr.mxu0 0.0
        %351 = vmatpush1.msra.mxu0 0.0
        %352 = vmatprep.subr.mxu0 0.0
        %353 = vmatpush1.msra.mxu0 0.0
        %354 = vmatprep.subr.mxu0 0.0
        %355 = vmatpush1.msra.mxu0 0.0
        %356 = vmatprep.subr.mxu0 0.0
        %357 = vmatpush1.msra.mxu0 0.0
        %358 = vmatprep.subr.mxu0 0.0
        %359 = vmatpush1.msra.mxu0 0.0
        %360 = vmatprep.subr.mxu0 0.0
        %361 = vmatpush1.msra.mxu0 0.0
        %362 = vmatprep.subr.mxu0 0.0
        %363 = vmatpush1.msra.mxu0 0.0
        %364 = vmatprep.mubr.f32.mxu0 0.0
        %365 = vmatmul.mubr.f32.gmra.mrb[0].mxu0 %v292
        %v366 = vpop.f32.mrb[0].mxu0
        %v367 = vadd.f32 0.0, %v366
        %v368 = vpop.f32.mrb[0].mxu0
        %369 = vmatprep.mubr.f32.mxu0 0.0
        %370 = vmatmul.mubr.f32.gmra.mrb[0].mxu0 %v295
        %v371 = vpop.f32.mrb[0].mxu0
        %v372 = vadd.f32 0.0, %v371
        %v373 = vpop.f32.mrb[0].mxu0
        %374 = vmatprep.mubr.f32.mxu0 0.0
        %375 = vmatmul.mubr.f32.gmra.mrb[0].mxu0 %v298
        %v376 = vpop.f32.mrb[0].mxu0
        %v377 = vadd.f32 0.0, %v376
        %v378 = vpop.f32.mrb[0].mxu0
        %379 = vdwg.mxu0
        %v380 = vld [vmem:[%s2] sm:$0xff]
        %v381 = vld [vmem:[%s2 + $0x8] sm:$0xff]
        %v382 = vld [vmem:[%s2 + $0x10] sm:$0xff]
        %v383 = vld [vmem:[%s2 + $0x18] sm:$0xff]
        %v384 = vld [vmem:[%s3] sm:$0xff]
        %v385 = vld [vmem:[%s3 + $0x8] sm:$0xff]
        %v386 = vld [vmem:[%s3 + $0x10] sm:$0xff]
        %v387 = vld [vmem:[%s3 + $0x18] sm:$0xff]
        %vm390 = vcmask 1045504
        %v391 = vrot.slane %v372, 2
        %v392 = vrot.slane %v377, 2
        %v393 = vsel %vm390, %v391, %v392
        %vm394 = vcmask 261120
        %v395 = vsel %vm394, %v393, 0
        %v397 = vsel %vm394, %v392, 0
        %399 = vmatprep.subr.mxu0 0.0
        %400 = vmatpush1.msra.mxu0 %v384
        %401 = vmatprep.subr.mxu0 0.0
        %402 = vmatpush1.msra.mxu0 %v385
        %403 = vmatprep.subr.mxu0 0.0
        %404 = vmatpush1.msra.mxu0 %v386
        %405 = vmatprep.subr.mxu0 0.0
        %406 = vmatpush1.msra.mxu0 %v387
        %407 = vmatprep.subr.mxu0 0.0
        %408 = vmatpush1.msra.mxu0 0.0
        %409 = vmatprep.subr.mxu0 0.0
        %410 = vmatpush1.msra.mxu0 0.0
        %411 = vmatprep.subr.mxu0 0.0
        %412 = vmatpush1.msra.mxu0 0.0
        %413 = vmatprep.subr.mxu0 0.0
        %414 = vmatpush1.msra.mxu0 0.0
        %415 = vmatprep.subr.mxu0 0.0
        %416 = vmatpush1.msra.mxu0 0.0
        %417 = vmatprep.subr.mxu0 0.0
        %418 = vmatpush1.msra.mxu0 0.0
        %419 = vmatprep.subr.mxu0 0.0
        %420 = vmatpush1.msra.mxu0 0.0
        %421 = vmatprep.subr.mxu0 0.0
        %422 = vmatpush1.msra.mxu0 0.0
        %423 = vmatprep.subr.mxu0 0.0
        %424 = vmatpush1.msra.mxu0 0.0
        %425 = vmatprep.subr.mxu0 0.0
        %426 = vmatpush1.msra.mxu0 0.0
        %427 = vmatprep.subr.mxu0 0.0
        %428 = vmatpush1.msra.mxu0 0.0
        %429 = vmatprep.subr.mxu0 0.0
        %430 = vmatpush1.msra.mxu0 0.0
        %431 = vmatprep.subr.mxu0 0.0
        %432 = vmatpush1.msra.mxu0 0.0
        %433 = vmatprep.subr.mxu0 0.0
        %434 = vmatpush1.msra.mxu0 0.0
        %435 = vmatprep.subr.mxu0 0.0
        %436 = vmatpush1.msra.mxu0 0.0
        %437 = vmatprep.subr.mxu0 0.0
        %438 = vmatpush1.msra.mxu0 0.0
        %439 = vmatprep.subr.mxu0 0.0
        %440 = vmatpush1.msra.mxu0 0.0
        %441 = vmatprep.subr.mxu0 0.0
        %442 = vmatpush1.msra.mxu0 0.0
        %443 = vmatprep.subr.mxu0 0.0
        %444 = vmatpush1.msra.mxu0 0.0
        %445 = vmatprep.subr.mxu0 0.0
        %446 = vmatpush1.msra.mxu0 0.0
        %447 = vmatprep.subr.mxu0 0.0
        %448 = vmatpush1.msra.mxu0 0.0
        %449 = vmatprep.subr.mxu0 0.0
        %450 = vmatpush1.msra.mxu0 0.0
        %451 = vmatprep.subr.mxu0 0.0
        %452 = vmatpush1.msra.mxu0 0.0
        %453 = vmatprep.subr.mxu0 0.0
        %454 = vmatpush1.msra.mxu0 0.0
        %455 = vmatprep.subr.mxu0 0.0
        %456 = vmatpush1.msra.mxu0 0.0
        %457 = vmatprep.subr.mxu0 0.0
        %458 = vmatpush1.msra.mxu0 0.0
        %459 = vmatprep.subr.mxu0 0.0
        %460 = vmatpush1.msra.mxu0 0.0
        %461 = vmatprep.subr.mxu0 0.0
        %462 = vmatpush1.msra.mxu0 0.0
        %463 = vmatprep.mubr.f32.mxu0 0.0
        %464 = vmatmul.mubr.f32.gmra.mrb[0].mxu0 %v395
        %v465 = vpop.f32.mrb[0].mxu0
        %v466 = vadd.f32 0.0, %v465
        %v467 = vpop.f32.mrb[0].mxu0
        %468 = vmatprep.mubr.f32.mxu0 0.0
        %469 = vmatmul.mubr.f32.gmra.mrb[0].mxu0 %v397
        %v470 = vpop.f32.mrb[0].mxu0
        %v471 = vadd.f32 0.0, %v470
        %v472 = vpop.f32.mrb[0].mxu0
        %473 = vdwg.mxu0
        %v475 = vsel %vm394, %v367, 0
        %v477 = vsel %vm394, %v372, 0
        %479 = vmatprep.subr.mxu0 0.0
        %480 = vmatpush1.msra.mxu0 %v380
        %481 = vmatprep.subr.mxu0 0.0
        %482 = vmatpush1.msra.mxu0 %v381
        %483 = vmatprep.subr.mxu0 0.0
        %484 = vmatpush1.msra.mxu0 %v382
        %485 = vmatprep.subr.mxu0 0.0
        %486 = vmatpush1.msra.mxu0 %v383
        %487 = vmatprep.subr.mxu0 0.0
        %488 = vmatpush1.msra.mxu0 0.0
        %489 = vmatprep.subr.mxu0 0.0
        %490 = vmatpush1.msra.mxu0 0.0
        %491 = vmatprep.subr.mxu0 0.0
        %492 = vmatpush1.msra.mxu0 0.0
        %493 = vmatprep.subr.mxu0 0.0
        %494 = vmatpush1.msra.mxu0 0.0
        %495 = vmatprep.subr.mxu0 0.0
        %496 = vmatpush1.msra.mxu0 0.0
        %497 = vmatprep.subr.mxu0 0.0
        %498 = vmatpush1.msra.mxu0 0.0
        %499 = vmatprep.subr.mxu0 0.0
        %500 = vmatpush1.msra.mxu0 0.0
        %501 = vmatprep.subr.mxu0 0.0
        %502 = vmatpush1.msra.mxu0 0.0
        %503 = vmatprep.subr.mxu0 0.0
        %504 = vmatpush1.msra.mxu0 0.0
        %505 = vmatprep.subr.mxu0 0.0
        %506 = vmatpush1.msra.mxu0 0.0
        %507 = vmatprep.subr.mxu0 0.0
        %508 = vmatpush1.msra.mxu0 0.0
        %509 = vmatprep.subr.mxu0 0.0
        %510 = vmatpush1.msra.mxu0 0.0
        %511 = vmatprep.subr.mxu0 0.0
        %512 = vmatpush1.msra.mxu0 0.0
        %513 = vmatprep.subr.mxu0 0.0
        %514 = vmatpush1.msra.mxu0 0.0
        %515 = vmatprep.subr.mxu0 0.0
        %516 = vmatpush1.msra.mxu0 0.0
        %517 = vmatprep.subr.mxu0 0.0
        %518 = vmatpush1.msra.mxu0 0.0
        %519 = vmatprep.subr.mxu0 0.0
        %520 = vmatpush1.msra.mxu0 0.0
        %521 = vmatprep.subr.mxu0 0.0
        %522 = vmatpush1.msra.mxu0 0.0
        %523 = vmatprep.subr.mxu0 0.0
        %524 = vmatpush1.msra.mxu0 0.0
        %525 = vmatprep.subr.mxu0 0.0
        %526 = vmatpush1.msra.mxu0 0.0
        %527 = vmatprep.subr.mxu0 0.0
        %528 = vmatpush1.msra.mxu0 0.0
        %529 = vmatprep.subr.mxu0 0.0
        %530 = vmatpush1.msra.mxu0 0.0
        %531 = vmatprep.subr.mxu0 0.0
        %532 = vmatpush1.msra.mxu0 0.0
        %533 = vmatprep.subr.mxu0 0.0
        %534 = vmatpush1.msra.mxu0 0.0
        %535 = vmatprep.subr.mxu0 0.0
        %536 = vmatpush1.msra.mxu0 0.0
        %537 = vmatprep.subr.mxu0 0.0
        %538 = vmatpush1.msra.mxu0 0.0
        %539 = vmatprep.subr.mxu0 0.0
        %540 = vmatpush1.msra.mxu0 0.0
        %541 = vmatprep.subr.mxu0 0.0
        %542 = vmatpush1.msra.mxu0 0.0
        %543 = vmatprep.mubr.f32.mxu0 0.0
        %544 = vmatmul.mubr.f32.gmra.mrb[0].mxu0 %v475
        %v545 = vpop.f32.mrb[0].mxu0
        %v546 = vadd.f32 %v466, %v545
        %v547 = vpop.f32.mrb[0].mxu0
        %548 = vmatprep.mubr.f32.mxu0 0.0
        %549 = vmatmul.mubr.f32.gmra.mrb[0].mxu0 %v477
        %v550 = vpop.f32.mrb[0].mxu0
        %v551 = vadd.f32 %v471, %v550
        %v552 = vpop.f32.mrb[0].mxu0
        %553 = vdwg.mxu0
        %v554 = vlaneseq
        %v555 = vshrl.u32 %v554, 7
        %v556 = vsub.s32 0, %v555
        %v557 = vrot.slane %v266, %v556
        %v558 = vadd.f32 %v546, %v557
        %v559 = vadd.f32 %v551, %v557
        %v560 = vmax.f32 %v558, 0.0
        %v561 = vmax.f32 %v559, 0.0
        %v562 = vlaneseq
        %v563 = vshrl.u32 %v562, 7
        %v564 = vsub.s32 2, %v563
        %v565 = vrot.slane %v266, %v564
        %v566 = vmul.f32 %v560, %v565
        %v567 = vmul.f32 %v561, %v565
        %v568 = vsel %vm394, %v566, 0.0
        %569 = vadd.xlane.f32.xlu0 %v568
        %v570 = vpop.xlane.xlu0 %569
        %vm571 = vcmask 254976
        %v572 = vsel %vm571, %v567, 0.0
        %573 = vadd.xlane.f32.xlu0 %v572
        %v574 = vpop.xlane.xlu0 %573
        %v575 = vlaneseq
        %v576 = vshrl.u32 %v575, 7
        %v577 = vsub.s32 4, %v576
        %v578 = vrot.slane %v266, %v577
        %v579 = vadd.f32 %v570, %v578
        %v580 = vadd.f32 %v574, %v578
        %v581 = vxor.u32 %v579, 2147483648
        %v582 = vxor.u32 %v580, 2147483648
        %v583 = vmul.f32 %v581, 1.442695
        %v584 = vpow.pop %v583
        %v585 = vmul.f32 %v582, 1.442695
        %v586 = vpow.pop %v585
        %v587 = vadd.f32 %v584, 1.0
        %v588 = vadd.f32 %v586, 1.0
        %v589 = vrcp.pop %v587
        %v590 = vmul.f32 1.0, %v589
        %v591 = vrcp.pop %v588
        %v592 = vmul.f32 1.0, %v591
        %vm593 = vcmask 7168
        %v594 = vsel %vm593, %v590, 0.0
        %vm595 = vcmask 1024
        %v596 = vsel %vm595, %v592, 0.0
        %v597 = vadd.f32 %v594, %v596
        %v598 = vrot.slane %v597, 4
        %v599 = vadd.f32 %v597, %v598
        %v600 = vrot.slane %v599, 2
        %v601 = vadd.f32 %v599, %v600
        %v602 = vrot.slane %v601, 1
        %v603 = vadd.f32 %v601, %v602
        %v604 = vrcp.pop 10.0
        %v605 = vmul.f32 %v603, %v604
        %v606 = vld [vmem:[%s4] sm:$0xff]
        %v607 = vld [vmem:[%s4 + $0x8] sm:$0xff]
        %v608 = vld [vmem:[%s4 + $0x10] sm:$0xff]
        %v609 = vld [vmem:[%s4 + $0x18] sm:$0xff]
        %v610 = vrot.slane %v377, 4
        %v612 = vrot.slane %v266, 1
        %v614 = vsel %vm394, %v610, 0
        %616 = vmatprep.subr.mxu0 0.0
        %617 = vmatpush1.msra.mxu0 %v606
        %618 = vmatprep.subr.mxu0 0.0
        %619 = vmatpush1.msra.mxu0 %v607
        %620 = vmatprep.subr.mxu0 0.0
        %621 = vmatpush1.msra.mxu0 %v608
        %622 = vmatprep.subr.mxu0 0.0
        %623 = vmatpush1.msra.mxu0 %v609
        %624 = vmatprep.subr.mxu0 0.0
        %625 = vmatpush1.msra.mxu0 0.0
        %626 = vmatprep.subr.mxu0 0.0
        %627 = vmatpush1.msra.mxu0 0.0
        %628 = vmatprep.subr.mxu0 0.0
        %629 = vmatpush1.msra.mxu0 0.0
        %630 = vmatprep.subr.mxu0 0.0
        %631 = vmatpush1.msra.mxu0 0.0
        %632 = vmatprep.subr.mxu0 0.0
        %633 = vmatpush1.msra.mxu0 0.0
        %634 = vmatprep.subr.mxu0 0.0
        %635 = vmatpush1.msra.mxu0 0.0
        %636 = vmatprep.subr.mxu0 0.0
        %637 = vmatpush1.msra.mxu0 0.0
        %638 = vmatprep.subr.mxu0 0.0
        %639 = vmatpush1.msra.mxu0 0.0
        %640 = vmatprep.subr.mxu0 0.0
        %641 = vmatpush1.msra.mxu0 0.0
        %642 = vmatprep.subr.mxu0 0.0
        %643 = vmatpush1.msra.mxu0 0.0
        %644 = vmatprep.subr.mxu0 0.0
        %645 = vmatpush1.msra.mxu0 0.0
        %646 = vmatprep.subr.mxu0 0.0
        %647 = vmatpush1.msra.mxu0 0.0
        %648 = vmatprep.subr.mxu0 0.0
        %649 = vmatpush1.msra.mxu0 0.0
        %650 = vmatprep.subr.mxu0 0.0
        %651 = vmatpush1.msra.mxu0 0.0
        %652 = vmatprep.subr.mxu0 0.0
        %653 = vmatpush1.msra.mxu0 0.0
        %654 = vmatprep.subr.mxu0 0.0
        %655 = vmatpush1.msra.mxu0 0.0
        %656 = vmatprep.subr.mxu0 0.0
        %657 = vmatpush1.msra.mxu0 0.0
        %658 = vmatprep.subr.mxu0 0.0
        %659 = vmatpush1.msra.mxu0 0.0
        %660 = vmatprep.subr.mxu0 0.0
        %661 = vmatpush1.msra.mxu0 0.0
        %662 = vmatprep.subr.mxu0 0.0
        %663 = vmatpush1.msra.mxu0 0.0
        %664 = vmatprep.subr.mxu0 0.0
        %665 = vmatpush1.msra.mxu0 0.0
        %666 = vmatprep.subr.mxu0 0.0
        %667 = vmatpush1.msra.mxu0 0.0
        %668 = vmatprep.subr.mxu0 0.0
        %669 = vmatpush1.msra.mxu0 0.0
        %670 = vmatprep.subr.mxu0 0.0
        %671 = vmatpush1.msra.mxu0 0.0
        %672 = vmatprep.subr.mxu0 0.0
        %673 = vmatpush1.msra.mxu0 0.0
        %674 = vmatprep.subr.mxu0 0.0
        %675 = vmatpush1.msra.mxu0 0.0
        %676 = vmatprep.subr.mxu0 0.0
        %677 = vmatpush1.msra.mxu0 0.0
        %678 = vmatprep.subr.mxu0 0.0
        %679 = vmatpush1.msra.mxu0 0.0
        %680 = vmatprep.mubr.f32.mxu0 0.0
        %681 = vmatmul.mubr.f32.gmra.mrb[0].mxu0 %v614
        %v682 = vpop.f32.mrb[0].mxu0
        %v683 = vadd.f32 %v612, %v682
        %v684 = vpop.f32.mrb[0].mxu0
        %685 = vdwg.mxu0
        %v686 = vmax.f32 %v683, 0.0
        %v687 = vrot.slane %v266, 3
        %v689 = vmul.f32 %v686, %v687
        %vm690 = vcmask 122880
        %v691 = vsel %vm690, %v689, 0.0
        %692 = vadd.xlane.f32.xlu0 %v691
        %v693 = vpop.xlane.xlu0 %692
        %v694 = vrot.slane %v266, 5
        %v696 = vadd.f32 %v693, %v694
        %v697 = vxor.u32 %v696, 2147483648
        %v698 = vmul.f32 %v697, 1.442695
        %v699 = vpow.pop %v698
        %v700 = vadd.f32 %v699, 1.0
        %v701 = vrcp.pop %v700
        %v702 = vmul.f32 1.0, %v701
        %704 = vrot.lane.b32.xlu0 %v702, 1
        %v705 = vpop.permute.xlu0 %704
        %v707 = vsel %vm593, %v605, %v705
        %vm708 = vcmask 8192
        %709 = vst.msk [vmem:[%s256] sm:$0x1] %vm708, %v707
        %s710 = sand.u32 %s164, 1
        %s711 = scalar_lea.sflag [#allocation3], %s710
        %s712 = sand.u32 %s164, 1
        %s713 = scalar_lea.vmem [#allocation2], %s712
        // Predicated region
        $region45: #{tpu_custom_call.1} parent=43 // pred_check
          %p714 = pneg %p174
        $region46: #{tpu_custom_call.1} parent=43 // pred_check_branch
          %716 = sbr.rel (%p714) target = $region48
        $region47: #{tpu_custom_call.1} parent=43 // pred_region
          %s718 = ssub.s32 16, 16
          %719 = vsyncadd %s711, %s718
          %s720 = smul.addr %s20, 16
          %s721 = scalar_lea.hbm %s6, %s720
          %s723 = sshll.u32 %s713, 4
          %s724 = int_to_ptr.vmem [resolvable:$true] %s723
          %726 = dma.vmem_to_hbm [thread:$0]  %s724, 16, %s721, %s711
        $region48: #{tpu_custom_call.1} parent=43 // pred_fallthru
          _
      $region44: #{tpu_custom_call.1} parent=5 // pred_fallthru
        _
      %p727 = scmp.le.s32.totalorder 2, %s15
      // Predicated region
      $region49: #{tpu_custom_call.1} parent=5 // pred_check
        %p728 = pneg %p727
      $region50: #{tpu_custom_call.1} parent=5 // pred_check_branch
        %730 = sbr.rel (%p728) target = $region52
      $region51: #{tpu_custom_call.1} parent=5 // pred_region
        %s731 = ssub.s32 %s15, 2
        // Predicated region
        $region53: #{tpu_custom_call.1} parent=51 // pred_check
          %p732 = pneg %p180
        $region54: #{tpu_custom_call.1} parent=51 // pred_check_branch
          %734 = sbr.rel (%p732) target = $region56
        $region55: #{tpu_custom_call.1} parent=51 // pred_region
          %s735 = sand.u32 %s165, 1
          %s736 = scalar_lea.sflag [#allocation3], %s735
          %s737 = sand.u32 %s165, 1
          %s738 = scalar_lea.vmem [#allocation2], %s737
          %739 = dma.done %s736, 16
        $region56: #{tpu_custom_call.1} parent=51 // pred_fallthru
          _
      $region52: #{tpu_custom_call.1} parent=5 // pred_fallthru
        _
    $region6: #{tpu_custom_call.1} parent=1 // loop_footer
      %s19 = sadd.s32 1, %s15
    $region7: #{tpu_custom_call.1} parent=1 // loop_footer_branch
      %14 = sbr.rel target = $region3
    $region8: #{tpu_custom_call.1} parent=1 // loop_exit
      _
    %740 = vsyncpa [#allocation3], 1
    %s741 = scalar_lea.sflag [#allocation3], 1
    %742 = vsyncpa %s741, 1

</llo_original>
